<compile_context>
chip_gen: v6e
topology: v6e:2x2x1
jax: 0.10.0
libtpu: 0.0.40
codegen_flags: <defaults>
</compile_context>

<pallas_src>
import functools

import jax
import jax.numpy as jnp
from jax.experimental import pallas as pl
from jax.experimental.pallas import tpu as pltpu


def _round_up(x, m):
    return ((x + m - 1) // m) * m


def _make_kernel(C, TC, nct, needs_col_mask):
    """Kernel closure over static Python sizes only (no traced constants)."""
    neg_big = -3.0e38  # plain float: finite "-inf" -> no NaN from inf-inf

    def accum(m_sc, l_sc, xv):
        tile_max = jnp.max(xv, axis=-1, keepdims=True)            # (TB, 1)
        m_new = jnp.maximum(m_sc[...], tile_max)
        alpha = jnp.exp(m_sc[...] - m_new)
        e = jnp.exp(xv - m_new)                                   # masked cols -> 0
        l_sc[...] = alpha * l_sc[...] + jnp.sum(e, axis=-1, keepdims=True)
        m_sc[...] = m_new

    def kernel(pred_ref, out_ref, m_sc, l_sc):
        j = pl.program_id(1)          # class-tile index (reduction axis)

        # --- init per batch tile -------------------------------------------
        @pl.when(j == 0)
        def _init():
            m_sc[...] = jnp.full(m_sc.shape, neg_big, jnp.float32)
            l_sc[...] = jnp.zeros(l_sc.shape, jnp.float32)

        x = pred_ref[...].astype(jnp.float32)                     # (TB, TC)

        if not needs_col_mask:
            # C is a multiple of TC: never any padded columns, no mask work.
            accum(m_sc, l_sc, x)
        else:
            last = nct - 1
            valid_last = C - last * TC                            # python int

            # Interior class tiles: mask-free fast path.
            @pl.when(j < last)
            def _interior():
                accum(m_sc, l_sc, x)

            # Last class tile: mask out-of-range columns so garbage in the
            # partial edge block cannot poison m/l of valid rows.
            @pl.when(j == last)
            def _edge():
                col = jax.lax.broadcasted_iota(jnp.int32, x.shape, 1)
                accum(m_sc, l_sc, jnp.where(col < valid_last, x, neg_big))

        # --- finalize: per-row logsumexp ------------------------------------
        @pl.when(j == nct - 1)
        def _finalize():
            out_ref[...] = m_sc[...] + jnp.log(l_sc[...])

    return kernel


@functools.partial(jax.jit, static_argnames=("tb_max", "tc_max"))
def vanilla_classifier_v2(pred, target, *, tb_max=256, tc_max=4096):
    """pred: (B, C) float (f32 or bf16), target: (B,) int -> scalar f32 loss."""
    B, C = pred.shape

    # Batch tile: multiple of 8; when B >= 16 aim for >= 2 batch tiles so the
    # "parallel" batch axis spans both TensorCores on megacore / v7x parts.
    if B >= 16:
        tb_want = max(8, _round_up(pl.cdiv(B, 2), 8))
    else:
        tb_want = _round_up(B, 8)
    TB = min(tb_max, tb_want)

    # Class tile: multiple of 128.  Default tc_max=4096 f32 (4 MiB tile, 8 MiB
    # double-buffered) fits the default scoped VMEM on v5e/v6e/v7x; bump via
    # tc_max on v6e/v7x if desired.
    TC = min(tc_max, _round_up(C, 128))

    nbt = pl.cdiv(B, TB)
    nct = pl.cdiv(C, TC)
    needs_col_mask = (C % TC) != 0

    kernel = _make_kernel(C, TC, nct, needs_col_mask)

    itemsize = jnp.dtype(pred.dtype).itemsize
    cost = pl.CostEstimate(
        flops=3 * B * C,
        transcendentals=B * C,
        bytes_accessed=B * C * itemsize + B * 4 + nbt * TB * 4,
    )

    # Per-row logsumexp; rows >= B of the last (partial) batch tile are garbage
    # and are sliced away below (all kernel math is strictly row-local).
    lse = pl.pallas_call(
        kernel,
        out_shape=jax.ShapeDtypeStruct((nbt * TB, 1), jnp.float32),
        grid_spec=pltpu.PrefetchScalarGridSpec(
            num_scalar_prefetch=0,
            grid=(nbt, nct),
            in_specs=[
                # pred: (TB, TC) tile, streamed & double-buffered, unpadded.
                pl.BlockSpec((TB, TC), lambda i, j: (i, j)),
            ],
            # output block resident across the class (reduction) axis
            out_specs=pl.BlockSpec((TB, 1), lambda i, j: (i, 0)),
            scratch_shapes=[pltpu.VMEM((TB, 1), jnp.float32)] * 2,  # m, l
        ),
        compiler_params=pltpu.CompilerParams(
            dimension_semantics=("parallel", "arbitrary")),
        cost_estimate=cost,
    )(pred)

    # Target-logit pick: B-element gather, negligible next to the B*C stream.
    picked = jnp.take_along_axis(
        pred, target.reshape(B, 1).astype(jnp.int32), axis=1
    ).astype(jnp.float32)

    # loss = -1/B * sum_b (pred[b, t_b] - logsumexp_b)
    return (-1.0 / B) * jnp.sum(picked[:, 0] - lse[:B, 0])


def _reference(pred, target):
    logp = jax.nn.log_softmax(pred.astype(jnp.float32), axis=1)
    B = pred.shape[0]
    picked = jnp.take_along_axis(logp, target.reshape(B, 1).astype(jnp.int32), axis=1)
    return (-1.0 / B) * jnp.sum(picked)


if __name__ == "__main__":
    key = jax.random.PRNGKey(0)

    # Small shapes consistent with the module's forward: pred (B, C), target (B,)
    k1, k2 = jax.random.split(key)
    B, C = 8, 32
    pred = jax.random.normal(k1, (B, C), dtype=jnp.float32)
    target = jax.random.randint(k2, (B,), 0, C, dtype=jnp.int32)

    loss = jax.block_until_ready(vanilla_classifier_v2(pred, target))
    ref = jax.block_until_ready(_reference(pred, target))
    assert jnp.allclose(loss, ref, rtol=1e-5, atol=1e-5), (loss, ref)

    # Multi-tile path: odd B/C (partial edge blocks, no wrapper padding),
    # several class tiles and batch tiles, tiny tile caps to exercise the grid.
    k3, k4 = jax.random.split(k2)
    B2, C2 = 20, 300
    pred2 = jax.random.normal(k3, (B2, C2), dtype=jnp.float32)
    target2 = jax.random.randint(k4, (B2,), 0, C2, dtype=jnp.int32)
    loss2 = jax.block_until_ready(
        vanilla_classifier_v2(pred2, target2, tb_max=8, tc_max=128))
    ref2 = jax.block_until_ready(_reference(pred2, target2))
    assert jnp.allclose(loss2, ref2, rtol=1e-5, atol=1e-5), (loss2, ref2)

    # bf16 input path (pred streamed in HBM dtype, cast to f32 in-kernel).
    pred3 = pred2.astype(jnp.bfloat16)
    loss3 = jax.block_until_ready(
        vanilla_classifier_v2(pred3, target2, tb_max=8, tc_max=128))
    ref3 = jax.block_until_ready(_reference(pred3, target2))
    assert jnp.allclose(loss3, ref3, rtol=2e-2, atol=2e-2), (loss3, ref3)

    # TODO(synk): PyTorch-style error on out-of-range targets is not replicated
    # (invalid targets silently gather an arbitrary logit instead of raising).
    print("KERNEL_OK")
</pallas_src>

<mosaic_0001>
module attributes {stable_mosaic.version = 11 : i64} {
  func.func @kernel(%arg0: i32, %arg1: i32, %arg2: memref<8x128xf32, #tpu.memory_space<vmem>>, %arg3: memref<8x1xf32, #tpu.memory_space<vmem>>, %arg4: memref<8x1xf32, #tpu.memory_space<vmem>>, %arg5: memref<8x1xf32, #tpu.memory_space<vmem>>) attributes {dimension_semantics = [#tpu.dimension_semantics<parallel>, #tpu.dimension_semantics<arbitrary>], iteration_bounds = array<i64: 1, 1>, scalar_prefetch = 0 : i64, scratch_operands = 2 : i64, tpu.core_type = #tpu.core_type<tc>, window_params = [{transform_indices = @transform_0, window_bounds = array<i64: 8, 128>}, {transform_indices = @transform_1, window_bounds = array<i64: 8, 1>}]} {
    %c0_i32 = arith.constant 0 : i32
    %0 = arith.cmpi eq, %arg1, %c0_i32 : i32
    %1 = arith.extui %0 : i1 to i32
    %c0_i32_0 = arith.constant 0 : i32
    %2 = arith.cmpi ne, %1, %c0_i32_0 : i32
    scf.if %2 {
      %cst = arith.constant -3.000000e+38 : f32
      %13 = vector.broadcast %cst : f32 to vector<8x1xf32>
      %c0_8 = arith.constant 0 : index
      %c0_9 = arith.constant 0 : index
      %14 = vector.load %arg4[%c0_8, %c0_9] : memref<8x1xf32, #tpu.memory_space<vmem>>, vector<8x1xf32>
      tpu.vector_store %arg4[%c0_8, %c0_9], %13 {strides = array<i32>} : memref<8x1xf32, #tpu.memory_space<vmem>>, vector<8x1xf32>,
      %cst_10 = arith.constant 0.000000e+00 : f32
      %15 = vector.broadcast %cst_10 : f32 to vector<8x1xf32>
      %c0_11 = arith.constant 0 : index
      %c0_12 = arith.constant 0 : index
      %16 = vector.load %arg5[%c0_11, %c0_12] : memref<8x1xf32, #tpu.memory_space<vmem>>, vector<8x1xf32>
      tpu.vector_store %arg5[%c0_11, %c0_12], %15 {strides = array<i32>} : memref<8x1xf32, #tpu.memory_space<vmem>>, vector<8x1xf32>,
    } else {
    }
    %c0 = arith.constant 0 : index
    %c0_1 = arith.constant 0 : index
    %3 = vector.load %arg2[%c0, %c0_1] : memref<8x128xf32, #tpu.memory_space<vmem>>, vector<8x128xf32>
    %c0_i32_2 = arith.constant 0 : i32
    %4 = arith.cmpi slt, %arg1, %c0_i32_2 : i32
    %5 = arith.extui %4 : i1 to i32
    %c0_i32_3 = arith.constant 0 : i32
    %6 = arith.cmpi ne, %5, %c0_i32_3 : i32
    scf.if %6 {
      %cst = arith.constant dense<0xFF800000> : vector<8xf32>
      %13 = vector.multi_reduction <maximumf>, %3, %cst [1] : vector<8x128xf32> to vector<8xf32>
      %14 = vector.shape_cast %13 : vector<8xf32> to vector<8x1xf32>
      %c0_8 = arith.constant 0 : index
      %c0_9 = arith.constant 0 : index
      %15 = vector.load %arg4[%c0_8, %c0_9] : memref<8x1xf32, #tpu.memory_space<vmem>>, vector<8x1xf32>
      %16 = arith.maximumf %15, %14 : vector<8x1xf32>
      %c0_10 = arith.constant 0 : index
      %c0_11 = arith.constant 0 : index
      %17 = vector.load %arg4[%c0_10, %c0_11] : memref<8x1xf32, #tpu.memory_space<vmem>>, vector<8x1xf32>
      %18 = arith.subf %17, %16 : vector<8x1xf32>
      %19 = math.exp %18 : vector<8x1xf32>
      %20 = vector.broadcast %16 : vector<8x1xf32> to vector<8x128xf32>
      %21 = arith.subf %3, %20 : vector<8x128xf32>
      %22 = math.exp %21 : vector<8x128xf32>
      %c0_12 = arith.constant 0 : index
      %c0_13 = arith.constant 0 : index
      %23 = vector.load %arg5[%c0_12, %c0_13] : memref<8x1xf32, #tpu.memory_space<vmem>>, vector<8x1xf32>
      %24 = arith.mulf %19, %23 : vector<8x1xf32>
      %cst_14 = arith.constant dense<0.000000e+00> : vector<8xf32>
      %25 = vector.multi_reduction <add>, %22, %cst_14 [1] : vector<8x128xf32> to vector<8xf32>
      %26 = vector.shape_cast %25 : vector<8xf32> to vector<8x1xf32>
      %27 = arith.addf %24, %26 : vector<8x1xf32>
      %c0_15 = arith.constant 0 : index
      %c0_16 = arith.constant 0 : index
      %28 = vector.load %arg5[%c0_15, %c0_16] : memref<8x1xf32, #tpu.memory_space<vmem>>, vector<8x1xf32>
      tpu.vector_store %arg5[%c0_15, %c0_16], %27 {strides = array<i32>} : memref<8x1xf32, #tpu.memory_space<vmem>>, vector<8x1xf32>,
      %c0_17 = arith.constant 0 : index
      %c0_18 = arith.constant 0 : index
      %29 = vector.load %arg4[%c0_17, %c0_18] : memref<8x1xf32, #tpu.memory_space<vmem>>, vector<8x1xf32>
      tpu.vector_store %arg4[%c0_17, %c0_18], %16 {strides = array<i32>} : memref<8x1xf32, #tpu.memory_space<vmem>>, vector<8x1xf32>,
    } else {
    }
    %c0_i32_4 = arith.constant 0 : i32
    %7 = arith.cmpi eq, %arg1, %c0_i32_4 : i32
    %8 = arith.extui %7 : i1 to i32
    %c0_i32_5 = arith.constant 0 : i32
    %9 = arith.cmpi ne, %8, %c0_i32_5 : i32
    scf.if %9 {
      %13 = tpu.iota {dimensions = array<i32: 1>} : vector<8x128xi32>
      %c32_i32 = arith.constant 32 : i32
      %14 = vector.broadcast %c32_i32 : i32 to vector<8x128xi32>
      %15 = arith.cmpi slt, %13, %14 : vector<8x128xi32>
      %cst = arith.constant -3.000000e+38 : f32
      %16 = vector.broadcast %cst : f32 to vector<8x128xf32>
      %17 = arith.select %15, %3, %16 : vector<8x128xi1>, vector<8x128xf32>
      %cst_8 = arith.constant dense<0xFF800000> : vector<8xf32>
      %18 = vector.multi_reduction <maximumf>, %17, %cst_8 [1] : vector<8x128xf32> to vector<8xf32>
      %19 = vector.shape_cast %18 : vector<8xf32> to vector<8x1xf32>
      %c0_9 = arith.constant 0 : index
      %c0_10 = arith.constant 0 : index
      %20 = vector.load %arg4[%c0_9, %c0_10] : memref<8x1xf32, #tpu.memory_space<vmem>>, vector<8x1xf32>
      %21 = arith.maximumf %20, %19 : vector<8x1xf32>
      %c0_11 = arith.constant 0 : index
      %c0_12 = arith.constant 0 : index
      %22 = vector.load %arg4[%c0_11, %c0_12] : memref<8x1xf32, #tpu.memory_space<vmem>>, vector<8x1xf32>
      %23 = arith.subf %22, %21 : vector<8x1xf32>
      %24 = math.exp %23 : vector<8x1xf32>
      %25 = vector.broadcast %21 : vector<8x1xf32> to vector<8x128xf32>
      %26 = arith.subf %17, %25 : vector<8x128xf32>
      %27 = math.exp %26 : vector<8x128xf32>
      %c0_13 = arith.constant 0 : index
      %c0_14 = arith.constant 0 : index
      %28 = vector.load %arg5[%c0_13, %c0_14] : memref<8x1xf32, #tpu.memory_space<vmem>>, vector<8x1xf32>
      %29 = arith.mulf %24, %28 : vector<8x1xf32>
      %cst_15 = arith.constant dense<0.000000e+00> : vector<8xf32>
      %30 = vector.multi_reduction <add>, %27, %cst_15 [1] : vector<8x128xf32> to vector<8xf32>
      %31 = vector.shape_cast %30 : vector<8xf32> to vector<8x1xf32>
      %32 = arith.addf %29, %31 : vector<8x1xf32>
      %c0_16 = arith.constant 0 : index
      %c0_17 = arith.constant 0 : index
      %33 = vector.load %arg5[%c0_16, %c0_17] : memref<8x1xf32, #tpu.memory_space<vmem>>, vector<8x1xf32>
      tpu.vector_store %arg5[%c0_16, %c0_17], %32 {strides = array<i32>} : memref<8x1xf32, #tpu.memory_space<vmem>>, vector<8x1xf32>,
      %c0_18 = arith.constant 0 : index
      %c0_19 = arith.constant 0 : index
      %34 = vector.load %arg4[%c0_18, %c0_19] : memref<8x1xf32, #tpu.memory_space<vmem>>, vector<8x1xf32>
      tpu.vector_store %arg4[%c0_18, %c0_19], %21 {strides = array<i32>} : memref<8x1xf32, #tpu.memory_space<vmem>>, vector<8x1xf32>,
    } else {
    }
    %c0_i32_6 = arith.constant 0 : i32
    %10 = arith.cmpi eq, %arg1, %c0_i32_6 : i32
    %11 = arith.extui %10 : i1 to i32
    %c0_i32_7 = arith.constant 0 : i32
    %12 = arith.cmpi ne, %11, %c0_i32_7 : i32
    scf.if %12 {
      %c0_8 = arith.constant 0 : index
      %c0_9 = arith.constant 0 : index
      %13 = vector.load %arg4[%c0_8, %c0_9] : memref<8x1xf32, #tpu.memory_space<vmem>>, vector<8x1xf32>
      %c0_10 = arith.constant 0 : index
      %c0_11 = arith.constant 0 : index
      %14 = vector.load %arg5[%c0_10, %c0_11] : memref<8x1xf32, #tpu.memory_space<vmem>>, vector<8x1xf32>
      %15 = math.log %14 : vector<8x1xf32>
      %16 = arith.addf %13, %15 : vector<8x1xf32>
      %c0_12 = arith.constant 0 : index
      %c0_13 = arith.constant 0 : index
      %17 = vector.load %arg3[%c0_12, %c0_13] : memref<8x1xf32, #tpu.memory_space<vmem>>, vector<8x1xf32>
      tpu.vector_store %arg3[%c0_12, %c0_13], %16 {strides = array<i32>} : memref<8x1xf32, #tpu.memory_space<vmem>>, vector<8x1xf32>,
    } else {
    }
    return
  }
  func.func @transform_0(%arg0: i32, %arg1: i32) -> (i32, i32) {
    %c0_i32 = arith.constant 0 : i32
    return %arg0, %arg1 : i32, i32
  }
  func.func @transform_1(%arg0: i32, %arg1: i32) -> (i32, i32) {
    %c0_i32 = arith.constant 0 : i32
    %c0_i32_0 = arith.constant 0 : i32
    return %arg0, %c0_i32 : i32, i32
  }
}

</mosaic_0001>

<llo_original>
// kernel: vanilla_classifier_v2.1
$region0: #{vanilla_classifier_v2.1}
  #allocation0 [shape = 'u32[]', space=smem, size = 0x4, offset = 0x4, fixed_abs, tag = 'smem constant byte address 0x4 - core index']
  #allocation1 [shape = 'u32[144,128]{1,0:T(1,128)}', space=vmem, size = 0x12000, scoped, tag = 'internal scratch']
  #allocation2 [shape = 'f32[8,1]{1,0:T(8,128)}', space=vmem, size = 0x1000, scoped, tag = 'scratch operand']
  #allocation3 [shape = 'f32[8,1]{1,0:T(8,128)}', space=vmem, size = 0x1000, scoped, tag = 'scratch operand']
  %s0 = inlined_call_operand.hbm [shape: f32[8,32], index: 0, kind: input, shape index: {}]
  %s1 = inlined_call_operand.vmem [shape: f32[8,1], index: 1, kind: output, shape index: {}]
  %s2 = sld [smem:[#allocation0]]
  $region30: #{vanilla_classifier_v2.1} parent=0
    _
  %s4 = ssub.s32 1, %s2
  %s5 = scalar_select 0, %s4, %s2
  $region1: #{vanilla_classifier_v2.1} parent=0
    #allocation4 [shape = 'u8[4096]{0}', space=vmem, size = 0x1000, scoped, tag = 'input window, operand 0, single buffered']
    #allocation5 [shape = 's32[1]{0}', space=sflag, size = 0x4, scoped, tag = 'scoped memory for vanilla_classifier_v2.1']
    %6 = vsyncpa [#allocation5], 0
    // Predicated region
    $region2: #{vanilla_classifier_v2.1} parent=1 // pred_check
      _
    $region3: #{vanilla_classifier_v2.1} parent=1 // pred_check_branch
      %8 = sbr.rel (0) target = $region5
    $region4: #{vanilla_classifier_v2.1} parent=1 // pred_region
      %s10 = ssub.s32 128, 128
      %11 = vsyncadd [#allocation5], %s10
      %s13 = sshll.u32 [#allocation4], 4
      %s14 = int_to_ptr.vmem [resolvable:$true] %s13
      %16 = dma.hbm_to_vmem [thread:$0]  %s0, 128, %s14, [#allocation5]
    $region5: #{vanilla_classifier_v2.1} parent=1 // pred_fallthru
      _
    // Predicated region
    $region6: #{vanilla_classifier_v2.1} parent=1 // pred_check
      _
    $region7: #{vanilla_classifier_v2.1} parent=1 // pred_check_branch
      %18 = sbr.rel (0) target = $region9
    $region8: #{vanilla_classifier_v2.1} parent=1 // pred_region
      %19 = dma.done [#allocation5], 128
    $region9: #{vanilla_classifier_v2.1} parent=1 // pred_fallthru
      _
    %p20 = scmp.eq.s32.totalorder 0, 0
    // Predicated region
    $region10: #{vanilla_classifier_v2.1} parent=1 // pred_check
      %p21 = pneg %p20
    $region11: #{vanilla_classifier_v2.1} parent=1 // pred_check_branch
      %23 = sbr.rel (%p21) target = $region13
    $region12: #{vanilla_classifier_v2.1} parent=1 // pred_region
      %vm24 = vcmask 7168
      %25 = vst.msk [vmem:[#allocation2] sm:$0xff] %vm24, -3e+38
      %26 = vst.msk [vmem:[#allocation3] sm:$0xff] %vm24, 0.0
    $region13: #{vanilla_classifier_v2.1} parent=1 // pred_fallthru
      _
    %v27 = vld [vmem:[#allocation4] sm:$0xff]
    %p28 = scmp.lt.s32.totalorder 0, 0
    // Predicated region
    $region14: #{vanilla_classifier_v2.1} parent=1 // pred_check
      %p29 = pneg %p28
    $region15: #{vanilla_classifier_v2.1} parent=1 // pred_check_branch
      %31 = sbr.rel (%p29) target = $region17
    $region16: #{vanilla_classifier_v2.1} parent=1 // pred_region
      %32 = vmax.xlane.f32.xlu0 %v27
      %v33 = vpop.xlane.xlu0 %32
      %v34 = vld [vmem:[#allocation2] sm:$0xff]
      %v35 = vmax.f32 %v34, %v33
      %v36 = vsub.f32 %v34, %v35
      %v37 = vmul.f32 %v36, 1.442695
      %v38 = vpow.pop %v37
      %40 = vset.pattern.permute.xlu0 0
      %41 = vperm.xlu0 %40, %v35
      %v42 = vpop.permute.xlu0 %41
      %v44 = vsub.f32 %v27, %v42
      %v45 = vmul.f32 %v44, 1.442695
      %v46 = vpow.pop %v45
      %v47 = vld [vmem:[#allocation3] sm:$0xff]
      %v48 = vmul.f32 %v38, %v47
      %49 = vadd.xlane.f32.xlu0 %v46
      %v50 = vpop.xlane.xlu0 %49
      %v51 = vadd.f32 %v48, %v50
      %vm52 = vcmask 7168
      %53 = vst.msk [vmem:[#allocation3] sm:$0xff] %vm52, %v51
      %54 = vst.msk [vmem:[#allocation2] sm:$0xff] %vm52, %v35
    $region17: #{vanilla_classifier_v2.1} parent=1 // pred_fallthru
      _
    // Predicated region
    $region18: #{vanilla_classifier_v2.1} parent=1 // pred_check
      %p55 = pneg %p20
    $region19: #{vanilla_classifier_v2.1} parent=1 // pred_check_branch
      %57 = sbr.rel (%p55) target = $region21
    $region20: #{vanilla_classifier_v2.1} parent=1 // pred_region
      %v58 = vlaneseq
      %v59 = vand.u32 %v58, 127
      %vm60 = vcmp.lt.s32.totalorder %v59, 32
      %v61 = vsel %vm60, %v27, -3e+38
      %62 = vmax.xlane.f32.xlu0 %v61
      %v63 = vpop.xlane.xlu0 %62
      %v64 = vld [vmem:[#allocation2] sm:$0xff]
      %v65 = vmax.f32 %v64, %v63
      %v66 = vsub.f32 %v64, %v65
      %v67 = vmul.f32 %v66, 1.442695
      %v68 = vpow.pop %v67
      %70 = vset.pattern.permute.xlu0 0
      %71 = vperm.xlu0 %70, %v65
      %v72 = vpop.permute.xlu0 %71
      %v74 = vsub.f32 %v61, %v72
      %v75 = vmul.f32 %v74, 1.442695
      %v76 = vpow.pop %v75
      %v77 = vld [vmem:[#allocation3] sm:$0xff]
      %v78 = vmul.f32 %v68, %v77
      %79 = vadd.xlane.f32.xlu0 %v76
      %v80 = vpop.xlane.xlu0 %79
      %v81 = vadd.f32 %v78, %v80
      %vm82 = vcmask 7168
      %83 = vst.msk [vmem:[#allocation3] sm:$0xff] %vm82, %v81
      %84 = vst.msk [vmem:[#allocation2] sm:$0xff] %vm82, %v65
      %v85 = vld [vmem:[#allocation2] sm:$0xff]
      %v86 = vld [vmem:[#allocation3] sm:$0xff]
      %v87 = vlog2.pop %v86
      %v88 = vmul.f32 %v87, 0.6931472
      %v89 = vadd.f32 %v85, %v88
      %90 = vst.msk [vmem:[%s1] sm:$0xff] %vm82, %v89
    $region21: #{vanilla_classifier_v2.1} parent=1 // pred_fallthru
      _
    // Predicated region
    $region22: #{vanilla_classifier_v2.1} parent=1 // pred_check
      _
    $region23: #{vanilla_classifier_v2.1} parent=1 // pred_check_branch
      %92 = sbr.rel (0) target = $region25
    $region24: #{vanilla_classifier_v2.1} parent=1 // pred_region
      _
    $region25: #{vanilla_classifier_v2.1} parent=1 // pred_fallthru
      _
    // Predicated region
    $region26: #{vanilla_classifier_v2.1} parent=1 // pred_check
      _
    $region27: #{vanilla_classifier_v2.1} parent=1 // pred_check_branch
      %94 = sbr.rel (0) target = $region29
    $region28: #{vanilla_classifier_v2.1} parent=1 // pred_region
      _
    $region29: #{vanilla_classifier_v2.1} parent=1 // pred_fallthru
      _
    %95 = vsyncpa [#allocation5], 1

</llo_original>
